<compile_context>
chip_gen: v6e
topology: v6e:2x2x1
jax: 0.10.0
libtpu: 0.0.40
codegen_flags: <defaults>
</compile_context>

<pallas_src>
import functools

import jax
import jax.numpy as jnp
from jax.experimental import pallas as pl
from jax.experimental.pallas import tpu as pltpu


def _round_up(x, m):
    return -(-x // m) * m


def _mxu_lane_multiple():
    """256 on v6e/v7x (2x256^2 MXU), 128 on v5e and older / unknown."""
    try:
        kind = jax.devices()[0].device_kind.lower()
    except Exception:
        return 128
    for tag in ("v2", "v3", "v4", "v5"):
        if tag in kind:
            return 128
    return 256


def _pad_feature_dim(d, lane_mult):
    # Real dims <=128 stay exact: all blocks that carry them are full-array in
    # that dimension, so they are exempt from the (8,128) block rule.  Only
    # dims >128 get padded so the MXU contraction/N widths stay native.
    if d <= 128:
        return d
    return _round_up(d, lane_mult)


def _pad_output_dim(d, lane_mult):
    # The HBM output lane dim must be a multiple of 128 for unmasked stores.
    if d <= 128 or lane_mult == 128:
        return _round_up(d, 128)
    return _round_up(d, 256)


def _choose_tile_m(n_rows):
    n8 = _round_up(n_rows, 8)
    if n8 <= 256:
        return n8                      # one small tile; overhead dominates
    if n8 <= 1024:
        # >=2 row tiles so ("parallel",) can shard across both v7x TensorCores
        # while keeping row padding minimal.
        return _round_up(-(-n_rows // 2), 8)
    best_t, best_waste = 512, _round_up(n_rows, 512) - n_rows
    for t in (448, 384, 320, 256):
        waste = _round_up(n_rows, t) - n_rows
        if waste < best_waste:
            best_t, best_waste = t, waste
    return best_t


def _vmem_limit_bytes(tile_m, dims_pad, num_layers, weight_buffers):
    """Resident-footprint estimate: weights/biases + pipelined x/out tiles."""
    def tile_bytes(rows, cols, itemsize):
        return _round_up(max(rows, 1), 8) * _round_up(max(cols, 1), 128) * itemsize

    need = 0
    for l in range(num_layers):
        need += weight_buffers * tile_bytes(dims_pad[l], dims_pad[l + 1], 2)  # bf16 W
        need += weight_buffers * tile_bytes(1, dims_pad[l + 1], 4)            # f32 bias
    need += 2 * tile_bytes(tile_m, dims_pad[0], 2)    # double-buffered x tile (bf16)
    need += 2 * tile_bytes(tile_m, dims_pad[-1], 4)   # double-buffered out tile (f32)
    need += 3 * tile_bytes(tile_m, max(dims_pad), 4)  # live intermediates (f32 acc + bf16 h)
    need += 2 * 1024 * 1024                           # compiler scratch slack
    return int(min(max(need, 16 * 1024 * 1024), 100 * 1024 * 1024))


# ----------------------------- Pallas kernel ------------------------------ #
def _mlp_kernel(num_layers, x_ref, *refs):
    """One row tile: h <- relu(h @ W_l + b_l) for l < L-1; last layer linear."""
    o_ref = refs[-1]
    h = x_ref[...]                                   # bf16 (tile_m, d0)
    for l in range(num_layers):
        w = refs[2 * l][...]                         # bf16 (d_l, d_{l+1})
        b = refs[2 * l + 1][...]                     # f32  (1,   d_{l+1})
        acc = jnp.dot(h, w, preferred_element_type=jnp.float32) + b
        if l < num_layers - 1:                       # last LinearBlock: activation='none'
            h = jnp.maximum(acc, 0.0).astype(jnp.bfloat16)  # bf16 for the next MXU pass
        else:
            o_ref[...] = acc.astype(o_ref.dtype)


# -------------------------- one-time parameter prep ------------------------ #
def prepare_mlp_params(weights, biases):
    """Transpose/pad/cast the static parameters ONCE (hoisted out of forward).

    weights: tuple of (out_l, in_l) arrays (PyTorch nn.Linear layout).
    biases:  tuple of (out_l,) arrays.
    """
    lane_mult = _mxu_lane_multiple()
    num_layers = len(weights)
    dims = [int(weights[0].shape[1])] + [int(w.shape[0]) for w in weights]
    dims_pad = [_pad_feature_dim(d, lane_mult) for d in dims]
    dims_pad[-1] = _pad_output_dim(dims[-1], lane_mult)

    w_pad, b_pad = [], []
    for l, (w, b) in enumerate(zip(weights, biases)):
        din, dout = dims[l], dims[l + 1]
        dinp, doutp = dims_pad[l], dims_pad[l + 1]
        wt = jnp.asarray(w, jnp.float32).T                      # (in, out): kernel does h @ W
        wt = jnp.pad(wt, ((0, dinp - din), (0, doutp - dout)))  # zero pad is inert
        w_pad.append(wt.astype(jnp.bfloat16))                   # bf16 MXU datapath
        bp = jnp.pad(jnp.asarray(b, jnp.float32), (0, doutp - dout)).reshape(1, doutp)
        b_pad.append(bp)                                        # bias stays f32
    return dict(num_layers=num_layers, dims=tuple(dims), dims_pad=tuple(dims_pad),
                weights=tuple(w_pad), biases=tuple(b_pad))


# --------------------------------- forward --------------------------------- #
_SINGLE_BUFFER_WEIGHTS_OK = None   # cached probe: does pl.Buffered(1) lower here?


def mlp_forward(x, params):
    """Forward of MLP(norm='none', activ='relu'); matches `x.view(x.size(0), -1)`."""
    global _SINGLE_BUFFER_WEIGHTS_OK
    num_layers = params["num_layers"]
    dims, dims_pad = params["dims"], params["dims_pad"]

    N = x.shape[0]
    x2 = jnp.reshape(x, (N, -1))
    assert x2.shape[1] == dims[0], (x2.shape, dims)

    tile_m = _choose_tile_m(N)
    M_pad = _round_up(N, tile_m)
    x_p = jnp.pad(x2.astype(jnp.bfloat16),
                  ((0, M_pad - N), (0, dims_pad[0] - dims[0])))

    operands = [x_p]
    for w, b in zip(params["weights"], params["biases"]):
        operands += [w, b]

    flops = 2 * M_pad * sum(dims_pad[l] * dims_pad[l + 1] for l in range(num_layers))
    bytes_accessed = (
        2 * M_pad * dims_pad[0] + 4 * M_pad * dims_pad[-1]
        + sum(2 * dims_pad[l] * dims_pad[l + 1] + 4 * dims_pad[l + 1]
              for l in range(num_layers)))

    def run(single_buffer_weights):
        # Grid-invariant weight/bias blocks: single-buffer to halve their VMEM.
        wt_kwargs = ({"pipeline_mode": pl.Buffered(1)} if single_buffer_weights else {})
        in_specs = [pl.BlockSpec((tile_m, dims_pad[0]), lambda i: (i, 0))]
        for l in range(num_layers):
            dinp, doutp = dims_pad[l], dims_pad[l + 1]
            in_specs.append(pl.BlockSpec((dinp, doutp), lambda i: (0, 0), **wt_kwargs))
            in_specs.append(pl.BlockSpec((1, doutp), lambda i: (0, 0), **wt_kwargs))
        vmem_limit = _vmem_limit_bytes(tile_m, dims_pad, num_layers,
                                       1 if single_buffer_weights else 2)
        return pl.pallas_call(
            functools.partial(_mlp_kernel, num_layers),
            out_shape=jax.ShapeDtypeStruct((M_pad, dims_pad[-1]), jnp.float32),
            grid_spec=pltpu.PrefetchScalarGridSpec(
                num_scalar_prefetch=0,
                grid=(M_pad // tile_m,),
                in_specs=in_specs,
                out_specs=pl.BlockSpec((tile_m, dims_pad[-1]), lambda i: (i, 0)),
            ),
            compiler_params=pltpu.CompilerParams(
                dimension_semantics=("parallel",),
                vmem_limit_bytes=vmem_limit,
            ),
            cost_estimate=pl.CostEstimate(
                flops=flops, transcendentals=0, bytes_accessed=bytes_accessed),
        )(*operands)

    if _SINGLE_BUFFER_WEIGHTS_OK is None:
        try:
            out = run(True)
            _SINGLE_BUFFER_WEIGHTS_OK = True
        except Exception:
            # TODO(synk): this jax build rejected pl.Buffered(1); fall back to
            # the default (double-buffered) weight blocks.
            out = run(False)
            _SINGLE_BUFFER_WEIGHTS_OK = False
    else:
        out = run(_SINGLE_BUFFER_WEIGHTS_OK)

    return out[:N, :dims[-1]]


# --------------------------- references (pure JAX) -------------------------- #
def _reference_f32(x, weights, biases):
    """Exact module semantics in f32."""
    h = jnp.reshape(x, (x.shape[0], -1)).astype(jnp.float32)
    L = len(weights)
    for l, (w, b) in enumerate(zip(weights, biases)):
        h = h @ jnp.asarray(w, jnp.float32).T + jnp.asarray(b, jnp.float32)
        if l < L - 1:
            h = jnp.maximum(h, 0.0)
    return h


def _reference_bf16(x, weights, biases):
    """Same bf16-input / f32-accumulate datapath the kernel uses."""
    h = jnp.reshape(x, (x.shape[0], -1)).astype(jnp.float32)
    L = len(weights)
    for l, (w, b) in enumerate(zip(weights, biases)):
        acc = jnp.dot(h.astype(jnp.bfloat16),
                      jnp.asarray(w, jnp.float32).T.astype(jnp.bfloat16),
                      preferred_element_type=jnp.float32) + jnp.asarray(b, jnp.float32)
        h = jnp.maximum(acc, 0.0) if l < L - 1 else acc
    return h


# ----------------------------------- main ----------------------------------- #
if __name__ == "__main__":
    # MLP(input_dim=8, output_dim=16, dim=32, n_blk=3, norm='none', activ='relu')
    N = 2
    input_dim, output_dim, dim, n_blk = 8, 16, 32, 3
    layer_dims = [input_dim] + [dim] * (n_blk - 1) + [output_dim]

    key = jax.random.PRNGKey(0)
    kx, key = jax.random.split(key)
    # Style-code-like input (N, input_dim, 1, 1); forward flattens it.
    x = jax.random.normal(kx, (N, input_dim, 1, 1), dtype=jnp.float32)

    # Deterministic synthetic parameters (PyTorch nn.Linear default init range).
    weights, biases = [], []
    for l in range(n_blk):
        fan_in, fan_out = layer_dims[l], layer_dims[l + 1]
        bound = 1.0 / (fan_in ** 0.5)
        kw_, kb_, key = jax.random.split(key, 3)
        weights.append(jax.random.uniform(kw_, (fan_out, fan_in),
                                          minval=-bound, maxval=bound,
                                          dtype=jnp.float32))
        biases.append(jax.random.uniform(kb_, (fan_out,),
                                         minval=-bound, maxval=bound,
                                         dtype=jnp.float32))
    weights, biases = tuple(weights), tuple(biases)

    params = prepare_mlp_params(weights, biases)       # one-time, hoisted param prep
    out = jax.block_until_ready(mlp_forward(x, params))

    ref_bf16 = _reference_bf16(x, weights, biases)
    ref_f32 = _reference_f32(x, weights, biases)
    assert out.shape == ref_f32.shape, (out.shape, ref_f32.shape)
    # Tight check vs. a reference mimicking the kernel's bf16 datapath.
    assert jnp.allclose(out, ref_bf16, atol=2e-3, rtol=2e-3), float(
        jnp.max(jnp.abs(out - ref_bf16)))
    # Looser check vs. exact f32 module semantics (bf16 MXU quantization).
    assert jnp.allclose(out, ref_f32, atol=5e-2, rtol=5e-2), float(
        jnp.max(jnp.abs(out - ref_f32)))

    print("KERNEL_OK")
</pallas_src>

<mosaic_0001>
module attributes {stable_mosaic.version = 11 : i64} {
  func.func @_mlp_kernel(%arg0: i32, %arg1: memref<8x8xbf16, #tpu.memory_space<vmem>>, %arg2: memref<8x32xbf16, #tpu.memory_space<vmem>>, %arg3: memref<1x32xf32, #tpu.memory_space<vmem>>, %arg4: memref<32x32xbf16, #tpu.memory_space<vmem>>, %arg5: memref<1x32xf32, #tpu.memory_space<vmem>>, %arg6: memref<32x128xbf16, #tpu.memory_space<vmem>>, %arg7: memref<1x128xf32, #tpu.memory_space<vmem>>, %arg8: memref<8x128xf32, #tpu.memory_space<vmem>>) attributes {dimension_semantics = [#tpu.dimension_semantics<parallel>], iteration_bounds = array<i64: 1>, scalar_prefetch = 0 : i64, scratch_operands = 0 : i64, tpu.core_type = #tpu.core_type<tc>, window_params = [{transform_indices = @transform_0, window_bounds = array<i64: 8, 8>}, {pipeline_mode = #tpu.pipeline_mode<synchronous>, transform_indices = @transform_1, window_bounds = array<i64: 8, 32>}, {pipeline_mode = #tpu.pipeline_mode<synchronous>, transform_indices = @transform_2, window_bounds = array<i64: 1, 32>}, {pipeline_mode = #tpu.pipeline_mode<synchronous>, transform_indices = @transform_3, window_bounds = array<i64: 32, 32>}, {pipeline_mode = #tpu.pipeline_mode<synchronous>, transform_indices = @transform_4, window_bounds = array<i64: 1, 32>}, {pipeline_mode = #tpu.pipeline_mode<synchronous>, transform_indices = @transform_5, window_bounds = array<i64: 32, 128>}, {pipeline_mode = #tpu.pipeline_mode<synchronous>, transform_indices = @transform_6, window_bounds = array<i64: 1, 128>}, {transform_indices = @transform_7, window_bounds = array<i64: 8, 128>}]} {
    %c0 = arith.constant 0 : index
    %c0_0 = arith.constant 0 : index
    %0 = vector.load %arg1[%c0, %c0_0] : memref<8x8xbf16, #tpu.memory_space<vmem>>, vector<8x8xbf16>
    %c0_1 = arith.constant 0 : index
    %c0_2 = arith.constant 0 : index
    %1 = vector.load %arg2[%c0_1, %c0_2] : memref<8x32xbf16, #tpu.memory_space<vmem>>, vector<8x32xbf16>
    %c0_3 = arith.constant 0 : index
    %c0_4 = arith.constant 0 : index
    %2 = vector.load %arg3[%c0_3, %c0_4] : memref<1x32xf32, #tpu.memory_space<vmem>>, vector<1x32xf32>
    %cst = arith.constant dense<0.000000e+00> : vector<8x32xf32>
    %3 = tpu.matmul %0, %1, %cst {dimension_numbers = #tpu.dot_dimension_numbers<[1], [0], [0], [1], [0, 0, 1, 1], [], []>} : vector<8x8xbf16>, vector<8x32xbf16>, vector<8x32xf32> -> vector<8x32xf32>
    %4 = vector.broadcast %2 : vector<1x32xf32> to vector<8x32xf32>
    %5 = arith.addf %3, %4 : vector<8x32xf32>
    %cst_5 = arith.constant 0.000000e+00 : f32
    %6 = vector.broadcast %cst_5 : f32 to vector<8x32xf32>
    %7 = arith.maximumf %5, %6 : vector<8x32xf32>
    %8 = arith.truncf %7 : vector<8x32xf32> to vector<8x32xbf16>
    %c0_6 = arith.constant 0 : index
    %c0_7 = arith.constant 0 : index
    %9 = vector.load %arg4[%c0_6, %c0_7] : memref<32x32xbf16, #tpu.memory_space<vmem>>, vector<32x32xbf16>
    %c0_8 = arith.constant 0 : index
    %c0_9 = arith.constant 0 : index
    %10 = vector.load %arg5[%c0_8, %c0_9] : memref<1x32xf32, #tpu.memory_space<vmem>>, vector<1x32xf32>
    %cst_10 = arith.constant dense<0.000000e+00> : vector<8x32xf32>
    %11 = tpu.matmul %8, %9, %cst_10 {dimension_numbers = #tpu.dot_dimension_numbers<[1], [0], [0], [1], [0, 0, 1, 1], [], []>} : vector<8x32xbf16>, vector<32x32xbf16>, vector<8x32xf32> -> vector<8x32xf32>
    %12 = vector.broadcast %10 : vector<1x32xf32> to vector<8x32xf32>
    %13 = arith.addf %11, %12 : vector<8x32xf32>
    %cst_11 = arith.constant 0.000000e+00 : f32
    %14 = vector.broadcast %cst_11 : f32 to vector<8x32xf32>
    %15 = arith.maximumf %13, %14 : vector<8x32xf32>
    %16 = arith.truncf %15 : vector<8x32xf32> to vector<8x32xbf16>
    %c0_12 = arith.constant 0 : index
    %c0_13 = arith.constant 0 : index
    %17 = vector.load %arg6[%c0_12, %c0_13] : memref<32x128xbf16, #tpu.memory_space<vmem>>, vector<32x128xbf16>
    %c0_14 = arith.constant 0 : index
    %c0_15 = arith.constant 0 : index
    %18 = vector.load %arg7[%c0_14, %c0_15] : memref<1x128xf32, #tpu.memory_space<vmem>>, vector<1x128xf32>
    %cst_16 = arith.constant dense<0.000000e+00> : vector<8x128xf32>
    %19 = tpu.matmul %16, %17, %cst_16 {dimension_numbers = #tpu.dot_dimension_numbers<[1], [0], [0], [1], [0, 0, 1, 1], [], []>} : vector<8x32xbf16>, vector<32x128xbf16>, vector<8x128xf32> -> vector<8x128xf32>
    %20 = vector.broadcast %18 : vector<1x128xf32> to vector<8x128xf32>
    %21 = arith.addf %19, %20 : vector<8x128xf32>
    %c0_17 = arith.constant 0 : index
    %c0_18 = arith.constant 0 : index
    %22 = vector.load %arg8[%c0_17, %c0_18] : memref<8x128xf32, #tpu.memory_space<vmem>>, vector<8x128xf32>
    tpu.vector_store %arg8[%c0_17, %c0_18], %21 {strides = array<i32>} : memref<8x128xf32, #tpu.memory_space<vmem>>, vector<8x128xf32>,
    return
  }
  func.func @transform_0(%arg0: i32) -> (i32, i32) {
    %c0_i32 = arith.constant 0 : i32
    %c0_i32_0 = arith.constant 0 : i32
    return %arg0, %c0_i32 : i32, i32
  }
  func.func @transform_1(%arg0: i32) -> (i32, i32) {
    %c0_i32 = arith.constant 0 : i32
    %c0_i32_0 = arith.constant 0 : i32
    %c0_i32_1 = arith.constant 0 : i32
    return %c0_i32, %c0_i32_0 : i32, i32
  }
  func.func @transform_2(%arg0: i32) -> (i32, i32) {
    %c0_i32 = arith.constant 0 : i32
    %c0_i32_0 = arith.constant 0 : i32
    %c0_i32_1 = arith.constant 0 : i32
    return %c0_i32, %c0_i32_0 : i32, i32
  }
  func.func @transform_3(%arg0: i32) -> (i32, i32) {
    %c0_i32 = arith.constant 0 : i32
    %c0_i32_0 = arith.constant 0 : i32
    %c0_i32_1 = arith.constant 0 : i32
    return %c0_i32, %c0_i32_0 : i32, i32
  }
  func.func @transform_4(%arg0: i32) -> (i32, i32) {
    %c0_i32 = arith.constant 0 : i32
    %c0_i32_0 = arith.constant 0 : i32
    %c0_i32_1 = arith.constant 0 : i32
    return %c0_i32, %c0_i32_0 : i32, i32
  }
  func.func @transform_5(%arg0: i32) -> (i32, i32) {
    %c0_i32 = arith.constant 0 : i32
    %c0_i32_0 = arith.constant 0 : i32
    %c0_i32_1 = arith.constant 0 : i32
    return %c0_i32, %c0_i32_0 : i32, i32
  }
  func.func @transform_6(%arg0: i32) -> (i32, i32) {
    %c0_i32 = arith.constant 0 : i32
    %c0_i32_0 = arith.constant 0 : i32
    %c0_i32_1 = arith.constant 0 : i32
    return %c0_i32, %c0_i32_0 : i32, i32
  }
  func.func @transform_7(%arg0: i32) -> (i32, i32) {
    %c0_i32 = arith.constant 0 : i32
    %c0_i32_0 = arith.constant 0 : i32
    return %arg0, %c0_i32 : i32, i32
  }
}

module attributes {stable_mosaic.version = 11 : i64} {
  func.func @_mlp_kernel(%arg0: i32, %arg1: memref<8x8xbf16, #tpu.memory_space<vmem>>, %arg2: memref<8x32xbf16, #tpu.memory_space<vmem>>, %arg3: memref<1x32xf32, #tpu.memory_space<vmem>>, %arg4: memref<32x32xbf16, #tpu.memory_space<vmem>>, %arg5: memref<1x32xf32, #tpu.memory_space<vmem>>, %arg6: memref<32x128xbf16, #tpu.memory_space<vmem>>, %arg7: memref<1x128xf32, #tpu.memory_space<vmem>>, %arg8: memref<8x128xf32, #tpu.memory_space<vmem>>) attributes {dimension_semantics = [#tpu.dimension_semantics<parallel>], iteration_bounds = array<i64: 1>, scalar_prefetch = 0 : i64, scratch_operands = 0 : i64, tpu.core_type = #tpu.core_type<tc>, window_params = [{transform_indices = @transform_0, window_bounds = array<i64: 8, 8>}, {pipeline_mode = #tpu.pipeline_mode<synchronous>, transform_indices = @transform_1, window_bounds = array<i64: 8, 32>}, {pipeline_mode = #tpu.pipeline_mode<synchronous>, transform_indices = @transform_2, window_bounds = array<i64: 1, 32>}, {pipeline_mode = #tpu.pipeline_mode<synchronous>, transform_indices = @transform_3, window_bounds = array<i64: 32, 32>}, {pipeline_mode = #tpu.pipeline_mode<synchronous>, transform_indices = @transform_4, window_bounds = array<i64: 1, 32>}, {pipeline_mode = #tpu.pipeline_mode<synchronous>, transform_indices = @transform_5, window_bounds = array<i64: 32, 128>}, {pipeline_mode = #tpu.pipeline_mode<synchronous>, transform_indices = @transform_6, window_bounds = array<i64: 1, 128>}, {transform_indices = @transform_7, window_bounds = array<i64: 8, 128>}]} {
    %c0 = arith.constant 0 : index
    %c0_0 = arith.constant 0 : index
    %0 = vector.load %arg1[%c0, %c0_0] : memref<8x8xbf16, #tpu.memory_space<vmem>>, vector<8x8xbf16>
    %c0_1 = arith.constant 0 : index
    %c0_2 = arith.constant 0 : index
    %1 = vector.load %arg2[%c0_1, %c0_2] : memref<8x32xbf16, #tpu.memory_space<vmem>>, vector<8x32xbf16>
    %c0_3 = arith.constant 0 : index
    %c0_4 = arith.constant 0 : index
    %2 = vector.load %arg3[%c0_3, %c0_4] : memref<1x32xf32, #tpu.memory_space<vmem>>, vector<1x32xf32>
    %cst = arith.constant dense<0.000000e+00> : vector<8x32xf32>
    %3 = tpu.matmul %0, %1, %cst {dimension_numbers = #tpu.dot_dimension_numbers<[1], [0], [0], [1], [0, 0, 1, 1], [], []>} : vector<8x8xbf16>, vector<8x32xbf16>, vector<8x32xf32> -> vector<8x32xf32>
    %4 = vector.broadcast %2 : vector<1x32xf32> to vector<8x32xf32>
    %5 = arith.addf %3, %4 : vector<8x32xf32>
    %cst_5 = arith.constant 0.000000e+00 : f32
    %6 = vector.broadcast %cst_5 : f32 to vector<8x32xf32>
    %7 = arith.maximumf %5, %6 : vector<8x32xf32>
    %8 = arith.truncf %7 : vector<8x32xf32> to vector<8x32xbf16>
    %c0_6 = arith.constant 0 : index
    %c0_7 = arith.constant 0 : index
    %9 = vector.load %arg4[%c0_6, %c0_7] : memref<32x32xbf16, #tpu.memory_space<vmem>>, vector<32x32xbf16>
    %c0_8 = arith.constant 0 : index
    %c0_9 = arith.constant 0 : index
    %10 = vector.load %arg5[%c0_8, %c0_9] : memref<1x32xf32, #tpu.memory_space<vmem>>, vector<1x32xf32>
    %cst_10 = arith.constant dense<0.000000e+00> : vector<8x32xf32>
    %11 = tpu.matmul %8, %9, %cst_10 {dimension_numbers = #tpu.dot_dimension_numbers<[1], [0], [0], [1], [0, 0, 1, 1], [], []>} : vector<8x32xbf16>, vector<32x32xbf16>, vector<8x32xf32> -> vector<8x32xf32>
    %12 = vector.broadcast %10 : vector<1x32xf32> to vector<8x32xf32>
    %13 = arith.addf %11, %12 : vector<8x32xf32>
    %cst_11 = arith.constant 0.000000e+00 : f32
    %14 = vector.broadcast %cst_11 : f32 to vector<8x32xf32>
    %15 = arith.maximumf %13, %14 : vector<8x32xf32>
    %16 = arith.truncf %15 : vector<8x32xf32> to vector<8x32xbf16>
    %c0_12 = arith.constant 0 : index
    %c0_13 = arith.constant 0 : index
    %17 = vector.load %arg6[%c0_12, %c0_13] : memref<32x128xbf16, #tpu.memory_space<vmem>>, vector<32x128xbf16>
    %c0_14 = arith.constant 0 : index
    %c0_15 = arith.constant 0 : index
    %18 = vector.load %arg7[%c0_14, %c0_15] : memref<1x128xf32, #tpu.memory_space<vmem>>, vector<1x128xf32>
    %cst_16 = arith.constant dense<0.000000e+00> : vector<8x128xf32>
    %19 = tpu.matmul %16, %17, %cst_16 {dimension_numbers = #tpu.dot_dimension_numbers<[1], [0], [0], [1], [0, 0, 1, 1], [], []>} : vector<8x32xbf16>, vector<32x128xbf16>, vector<8x128xf32> -> vector<8x128xf32>
    %20 = vector.broadcast %18 : vector<1x128xf32> to vector<8x128xf32>
    %21 = arith.addf %19, %20 : vector<8x128xf32>
    %c0_17 = arith.constant 0 : index
    %c0_18 = arith.constant 0 : index
    %22 = vector.load %arg8[%c0_17, %c0_18] : memref<8x128xf32, #tpu.memory_space<vmem>>, vector<8x128xf32>
    tpu.vector_store %arg8[%c0_17, %c0_18], %21 {strides = array<i32>} : memref<8x128xf32, #tpu.memory_space<vmem>>, vector<8x128xf32>,
    return
  }
  func.func @transform_0(%arg0: i32) -> (i32, i32) {
    %c0_i32 = arith.constant 0 : i32
    %c0_i32_0 = arith.constant 0 : i32
    return %arg0, %c0_i32 : i32, i32
  }
  func.func @transform_1(%arg0: i32) -> (i32, i32) {
    %c0_i32 = arith.constant 0 : i32
    %c0_i32_0 = arith.constant 0 : i32
    %c0_i32_1 = arith.constant 0 : i32
    return %c0_i32, %c0_i32_0 : i32, i32
  }
  func.func @transform_2(%arg0: i32) -> (i32, i32) {
    %c0_i32 = arith.constant 0 : i32
    %c0_i32_0 = arith.constant 0 : i32
    %c0_i32_1 = arith.constant 0 : i32
    return %c0_i32, %c0_i32_0 : i32, i32
  }
  func.func @transform_3(%arg0: i32) -> (i32, i32) {
    %c0_i32 = arith.constant 0 : i32
    %c0_i32_0 = arith.constant 0 : i32
    %c0_i32_1 = arith.constant 0 : i32
    return %c0_i32, %c0_i32_0 : i32, i32
  }
  func.func @transform_4(%arg0: i32) -> (i32, i32) {
    %c0_i32 = arith.constant 0 : i32
    %c0_i32_0 = arith.constant 0 : i32
    %c0_i32_1 = arith.constant 0 : i32
    return %c0_i32, %c0_i32_0 : i32, i32
  }
  func.func @transform_5(%arg0: i32) -> (i32, i32) {
    %c0_i32 = arith.constant 0 : i32
    %c0_i32_0 = arith.constant 0 : i32
    %c0_i32_1 = arith.constant 0 : i32
    return %c0_i32, %c0_i32_0 : i32, i32
  }
  func.func @transform_6(%arg0: i32) -> (i32, i32) {
    %c0_i32 = arith.constant 0 : i32
    %c0_i32_0 = arith.constant 0 : i32
    %c0_i32_1 = arith.constant 0 : i32
    return %c0_i32, %c0_i32_0 : i32, i32
  }
  func.func @transform_7(%arg0: i32) -> (i32, i32) {
    %c0_i32 = arith.constant 0 : i32
    %c0_i32_0 = arith.constant 0 : i32
    return %arg0, %c0_i32 : i32, i32
  }
}

</mosaic_0001>

<llo_original>
// kernel: tpu_custom_call.1
$region0: #{tpu_custom_call.1}
  #allocation0 [shape = 'u32[]', space=smem, size = 0x4, offset = 0x4, fixed_abs, tag = 'smem constant byte address 0x4 - core index']
  #allocation1 [shape = 'u32[144,128]{1,0:T(1,128)}', space=vmem, size = 0x12000, scoped, tag = 'internal scratch']
  %s0 = inlined_call_operand.hbm [shape: bf16[8,8], index: 0, kind: input, shape index: {}]
  %s1 = inlined_call_operand.hbm [shape: bf16[8,32], index: 1, kind: input, shape index: {}]
  %s2 = inlined_call_operand.vmem [shape: f32[1,32], index: 2, kind: input, shape index: {}]
  %s3 = inlined_call_operand.hbm [shape: bf16[32,32], index: 3, kind: input, shape index: {}]
  %s4 = inlined_call_operand.vmem [shape: f32[1,32], index: 4, kind: input, shape index: {}]
  %s5 = inlined_call_operand.hbm [shape: bf16[32,128], index: 5, kind: input, shape index: {}]
  %s6 = inlined_call_operand.vmem [shape: f32[1,128], index: 6, kind: input, shape index: {}]
  %s7 = inlined_call_operand.hbm [shape: f32[8,128], index: 7, kind: output, shape index: {}]
  %s8 = sld [smem:[#allocation0]]
  $region54: #{tpu_custom_call.1} parent=0
    _
  %s10 = ssub.s32 1, %s8
  %s11 = scalar_select 0, %s10, %s8
  $region1: #{tpu_custom_call.1} parent=0
    #allocation2 [shape = 'u8[2048]{0}', space=vmem, size = 0x800, scoped, tag = 'input window, operand 0, single buffered']
    #allocation3 [shape = 's32[1]{0}', space=sflag, size = 0x4, scoped, tag = 'scoped memory for tpu_custom_call.1']
    #allocation4 [shape = 's32[1]{0}', space=sflag, size = 0x4, scoped, tag = 'scoped memory for tpu_custom_call.1']
    #allocation5 [shape = 'u8[2048]{0}', space=vmem, size = 0x800, scoped, tag = 'input window, operand 1, single buffered']
    #allocation6 [shape = 's32[1]{0}', space=sflag, size = 0x4, scoped, tag = 'scoped memory for tpu_custom_call.1']
    #allocation7 [shape = 'u8[8192]{0}', space=vmem, size = 0x2000, scoped, tag = 'input window, operand 3, single buffered']
    #allocation8 [shape = 'u8[8192]{0}', space=vmem, size = 0x2000, scoped, tag = 'input window, operand 5, single buffered']
    #allocation9 [shape = 's32[1]{0}', space=sflag, size = 0x4, scoped, tag = 'scoped memory for tpu_custom_call.1']
    #allocation10 [shape = 'u8[4096]{0}', space=vmem, size = 0x1000, scoped, tag = 'output window, operand 0, single buffered']
    %12 = vsyncpa [#allocation3], 0
    %13 = vsyncpa [#allocation6], 0
    %14 = vsyncpa [#allocation9], 0
    %15 = vsyncpa [#allocation4], 0
    // Predicated region
    $region2: #{tpu_custom_call.1} parent=1 // pred_check
      _
    $region3: #{tpu_custom_call.1} parent=1 // pred_check_branch
      %17 = sbr.rel (0) target = $region5
    $region4: #{tpu_custom_call.1} parent=1 // pred_region
      %s19 = ssub.s32 64, 64
      %20 = vsyncadd [#allocation3], %s19
      %s22 = sshll.u32 [#allocation2], 4
      %s23 = int_to_ptr.vmem [resolvable:$true] %s22
      %25 = dma.hbm_to_vmem [thread:$0]  %s0, 64, %s23, [#allocation3]
    $region5: #{tpu_custom_call.1} parent=1 // pred_fallthru
      _
    // Predicated region
    $region6: #{tpu_custom_call.1} parent=1 // pred_check
      _
    $region7: #{tpu_custom_call.1} parent=1 // pred_check_branch
      %27 = sbr.rel (0) target = $region9
    $region8: #{tpu_custom_call.1} parent=1 // pred_region
      %s29 = ssub.s32 64, 64
      %30 = vsyncadd [#allocation6], %s29
      %s32 = sshll.u32 [#allocation5], 4
      %s33 = int_to_ptr.vmem [resolvable:$true] %s32
      %35 = dma.hbm_to_vmem [thread:$0]  %s1, 64, %s33, [#allocation6]
    $region9: #{tpu_custom_call.1} parent=1 // pred_fallthru
      _
    // Predicated region
    $region10: #{tpu_custom_call.1} parent=1 // pred_check
      _
    $region11: #{tpu_custom_call.1} parent=1 // pred_check_branch
      %37 = sbr.rel (0) target = $region13
    $region12: #{tpu_custom_call.1} parent=1 // pred_region
      _
    $region13: #{tpu_custom_call.1} parent=1 // pred_fallthru
      _
    // Predicated region
    $region14: #{tpu_custom_call.1} parent=1 // pred_check
      _
    $region15: #{tpu_custom_call.1} parent=1 // pred_check_branch
      %39 = sbr.rel (0) target = $region17
    $region16: #{tpu_custom_call.1} parent=1 // pred_region
      %s41 = ssub.s32 256, 256
      %42 = vsyncadd [#allocation6], %s41
      %s43 = sshll.u32 [#allocation7], 4
      %s44 = int_to_ptr.vmem [resolvable:$true] %s43
      %49 = dma.hbm_to_vmem [thread:$0]  %s3, 256, %s44, [#allocation6], 64, 64, 4
    $region17: #{tpu_custom_call.1} parent=1 // pred_fallthru
      _
    // Predicated region
    $region18: #{tpu_custom_call.1} parent=1 // pred_check
      _
    $region19: #{tpu_custom_call.1} parent=1 // pred_check_branch
      %51 = sbr.rel (0) target = $region21
    $region20: #{tpu_custom_call.1} parent=1 // pred_region
      _
    $region21: #{tpu_custom_call.1} parent=1 // pred_fallthru
      _
    // Predicated region
    $region22: #{tpu_custom_call.1} parent=1 // pred_check
      _
    $region23: #{tpu_custom_call.1} parent=1 // pred_check_branch
      %53 = sbr.rel (0) target = $region25
    $region24: #{tpu_custom_call.1} parent=1 // pred_region
      %s55 = ssub.s32 256, 256
      %56 = vsyncadd [#allocation9], %s55
      %s57 = sshll.u32 [#allocation8], 4
      %s58 = int_to_ptr.vmem [resolvable:$true] %s57
      %63 = dma.hbm_to_vmem [thread:$0]  %s5, 256, %s58, [#allocation9], 64, 64, 4
    $region25: #{tpu_custom_call.1} parent=1 // pred_fallthru
      _
    // Predicated region
    $region26: #{tpu_custom_call.1} parent=1 // pred_check
      _
    $region27: #{tpu_custom_call.1} parent=1 // pred_check_branch
      %65 = sbr.rel (0) target = $region29
    $region28: #{tpu_custom_call.1} parent=1 // pred_region
      _
    $region29: #{tpu_custom_call.1} parent=1 // pred_fallthru
      _
    // Predicated region
    $region30: #{tpu_custom_call.1} parent=1 // pred_check
      _
    $region31: #{tpu_custom_call.1} parent=1 // pred_check_branch
      %67 = sbr.rel (0) target = $region33
    $region32: #{tpu_custom_call.1} parent=1 // pred_region
      %68 = dma.done [#allocation3], 64
    $region33: #{tpu_custom_call.1} parent=1 // pred_fallthru
      _
    // Predicated region
    $region34: #{tpu_custom_call.1} parent=1 // pred_check
      _
    $region35: #{tpu_custom_call.1} parent=1 // pred_check_branch
      %70 = sbr.rel (0) target = $region37
    $region36: #{tpu_custom_call.1} parent=1 // pred_region
      %71 = dma.done [#allocation6], 64
    $region37: #{tpu_custom_call.1} parent=1 // pred_fallthru
      _
    // Predicated region
    $region38: #{tpu_custom_call.1} parent=1 // pred_check
      _
    $region39: #{tpu_custom_call.1} parent=1 // pred_check_branch
      %73 = sbr.rel (0) target = $region41
    $region40: #{tpu_custom_call.1} parent=1 // pred_region
      %74 = dma.done [#allocation6], 256
    $region41: #{tpu_custom_call.1} parent=1 // pred_fallthru
      _
    // Predicated region
    $region42: #{tpu_custom_call.1} parent=1 // pred_check
      _
    $region43: #{tpu_custom_call.1} parent=1 // pred_check_branch
      %76 = sbr.rel (0) target = $region45
    $region44: #{tpu_custom_call.1} parent=1 // pred_region
      %77 = dma.done [#allocation9], 256
    $region45: #{tpu_custom_call.1} parent=1 // pred_fallthru
      _
    %v79 = vld [vmem:[#allocation2] sm:$0xf]
    %v80 = vld [vmem:[#allocation5] sm:$0xf]
    %v81 = vld [vmem:[%s2] sm:$0x1]
    %v83 = vlaneseq
    %v84 = vshrl.u32 %v83, 7
    %v85 = vsub.s32 0, %v84
    %v86 = vrot.slane %v81, %v85
    %vm88 = vcmask 64512
    %v90 = vsel %vm88, %v79, 0
    %vm92 = vcmask 1043456
    %v94 = vsel %vm92, %v80, 0
    %96 = vmatprep.subr.bf16.mxu0 0
    %97 = vmatpush1.bf16.msra.mxu0 0
    %98 = vmatprep.subr.bf16.mxu0 0
    %99 = vmatpush1.bf16.msra.mxu0 0
    %100 = vmatprep.subr.bf16.mxu0 0
    %101 = vmatpush1.bf16.msra.mxu0 0
    %102 = vmatprep.subr.bf16.mxu0 0
    %103 = vmatpush1.bf16.msra.mxu0 0
    %104 = vmatprep.subr.bf16.mxu0 0
    %105 = vmatpush1.bf16.msra.mxu0 0
    %106 = vmatprep.subr.bf16.mxu0 0
    %107 = vmatpush1.bf16.msra.mxu0 0
    %108 = vmatprep.subr.bf16.mxu0 0
    %109 = vmatpush1.bf16.msra.mxu0 0
    %110 = vmatprep.subr.bf16.mxu0 0
    %111 = vmatpush1.bf16.msra.mxu0 %v94
    %112 = vmatprep.subr.bf16.mxu0 0
    %113 = vmatpush2.bf16.msra.mxu0 0
    %114 = vmatprep.subr.bf16.mxu0 0
    %115 = vmatpush2.bf16.msra.mxu0 0
    %116 = vmatprep.subr.bf16.mxu0 0
    %117 = vmatpush2.bf16.msra.mxu0 0
    %118 = vmatprep.subr.bf16.mxu0 0
    %119 = vmatpush2.bf16.msra.mxu0 0
    %120 = vmatprep.subr.bf16.mxu0 0
    %121 = vmatpush2.bf16.msra.mxu0 0
    %122 = vmatprep.subr.bf16.mxu0 0
    %123 = vmatpush2.bf16.msra.mxu0 0
    %124 = vmatprep.subr.bf16.mxu0 0
    %125 = vmatpush2.bf16.msra.mxu0 0
    %126 = vmatprep.subr.bf16.mxu0 0
    %127 = vmatpush2.bf16.msra.mxu0 0
    %128 = vmatprep.mubr.bf16.mxu0 0
    %129 = vmatmul.mubr.bf16.gmra.mxu0 %v90
    %v130 = vpop.f32.mrf.mxu0
    %v131 = vadd.f32 %v86, %v130
    %v132 = vpop.f32.mrf.mxu0
    %v133 = vpop.f32.mrf.mxu0
    %v134 = vpop.f32.mrf.mxu0
    %135 = vdwg.mxu0
    %v136 = vmax.f32 %v131, 0.0
    %v137 = vpack.c.bf16 %v136, %v136
    %v138 = vld [vmem:[#allocation7] sm:$0xf]
    %v139 = vld [vmem:[#allocation7 + $0x4] sm:$0xf]
    %v140 = vld [vmem:[#allocation7 + $0x8] sm:$0xf]
    %v141 = vld [vmem:[#allocation7 + $0xc] sm:$0xf]
    %v142 = vld [vmem:[%s4] sm:$0x1]
    %v144 = vlaneseq
    %v145 = vshrl.u32 %v144, 7
    %v146 = vsub.s32 0, %v145
    %v147 = vrot.slane %v142, %v146
    %v153 = vunpack.c.l.b16 %v138
    %v154 = vunpack.c.l.b16 %v139
    %v155 = vunpack.c.l.b16 %v140
    %v156 = vunpack.c.l.b16 %v141
    %v157 = vpack.c.b16 %v154, %v153
    %v158 = vpack.c.b16 %v156, %v155
    %vm161 = vcmask 261120
    %v163 = vsel %vm161, %v137, 0
    %165 = vmatprep.subr.bf16.mxu0 0
    %166 = vmatpush1.bf16.msra.mxu0 0
    %167 = vmatprep.subr.bf16.mxu0 0
    %168 = vmatpush1.bf16.msra.mxu0 0
    %169 = vmatprep.subr.bf16.mxu0 0
    %170 = vmatpush1.bf16.msra.mxu0 0
    %171 = vmatprep.subr.bf16.mxu0 0
    %172 = vmatpush1.bf16.msra.mxu0 0
    %173 = vmatprep.subr.bf16.mxu0 0
    %174 = vmatpush1.bf16.msra.mxu0 0
    %175 = vmatprep.subr.bf16.mxu0 0
    %176 = vmatpush1.bf16.msra.mxu0 0
    %177 = vmatprep.subr.bf16.mxu0 0
    %178 = vmatpush1.bf16.msra.mxu0 %v158
    %179 = vmatprep.subr.bf16.mxu0 0
    %180 = vmatpush1.bf16.msra.mxu0 %v157
    %181 = vmatprep.subr.bf16.mxu0 0
    %182 = vmatpush2.bf16.msra.mxu0 0
    %183 = vmatprep.subr.bf16.mxu0 0
    %184 = vmatpush2.bf16.msra.mxu0 0
    %185 = vmatprep.subr.bf16.mxu0 0
    %186 = vmatpush2.bf16.msra.mxu0 0
    %187 = vmatprep.subr.bf16.mxu0 0
    %188 = vmatpush2.bf16.msra.mxu0 0
    %189 = vmatprep.subr.bf16.mxu0 0
    %190 = vmatpush2.bf16.msra.mxu0 0
    %191 = vmatprep.subr.bf16.mxu0 0
    %192 = vmatpush2.bf16.msra.mxu0 0
    %193 = vmatprep.subr.bf16.mxu0 0
    %194 = vmatpush2.bf16.msra.mxu0 0
    %195 = vmatprep.subr.bf16.mxu0 0
    %196 = vmatpush2.bf16.msra.mxu0 0
    %197 = vmatprep.mubr.bf16.mxu0 0
    %198 = vmatmul.mubr.bf16.gmra.mxu0 %v163
    %v199 = vpop.f32.mrf.mxu0
    %v200 = vadd.f32 %v147, %v199
    %v201 = vpop.f32.mrf.mxu0
    %v202 = vpop.f32.mrf.mxu0
    %v203 = vpop.f32.mrf.mxu0
    %204 = vdwg.mxu0
    %v205 = vmax.f32 %v200, 0.0
    %v206 = vpack.c.bf16 %v205, %v205
    %v207 = vld [vmem:[#allocation8] sm:$0xf]
    %v208 = vld [vmem:[#allocation8 + $0x4] sm:$0xf]
    %v209 = vld [vmem:[#allocation8 + $0x8] sm:$0xf]
    %v210 = vld [vmem:[#allocation8 + $0xc] sm:$0xf]
    %v211 = vld [vmem:[%s6] sm:$0x1]
    %v213 = vlaneseq
    %v214 = vshrl.u32 %v213, 7
    %v215 = vsub.s32 0, %v214
    %v216 = vrot.slane %v211, %v215
    %v222 = vunpack.c.l.b16 %v207
    %v223 = vunpack.c.l.b16 %v208
    %v224 = vunpack.c.l.b16 %v209
    %v225 = vunpack.c.l.b16 %v210
    %v226 = vpack.c.b16 %v223, %v222
    %v227 = vpack.c.b16 %v225, %v224
    %v231 = vsel %vm161, %v206, 0
    %233 = vmatprep.subr.bf16.mxu0 0
    %234 = vmatpush1.bf16.msra.mxu0 0
    %235 = vmatprep.subr.bf16.mxu0 0
    %236 = vmatpush1.bf16.msra.mxu0 0
    %237 = vmatprep.subr.bf16.mxu0 0
    %238 = vmatpush1.bf16.msra.mxu0 0
    %239 = vmatprep.subr.bf16.mxu0 0
    %240 = vmatpush1.bf16.msra.mxu0 0
    %241 = vmatprep.subr.bf16.mxu0 0
    %242 = vmatpush1.bf16.msra.mxu0 0
    %243 = vmatprep.subr.bf16.mxu0 0
    %244 = vmatpush1.bf16.msra.mxu0 0
    %245 = vmatprep.subr.bf16.mxu0 0
    %246 = vmatpush1.bf16.msra.mxu0 %v227
    %247 = vmatprep.subr.bf16.mxu0 0
    %248 = vmatpush1.bf16.msra.mxu0 %v226
    %249 = vmatprep.subr.bf16.mxu0 0
    %250 = vmatpush2.bf16.msra.mxu0 0
    %251 = vmatprep.subr.bf16.mxu0 0
    %252 = vmatpush2.bf16.msra.mxu0 0
    %253 = vmatprep.subr.bf16.mxu0 0
    %254 = vmatpush2.bf16.msra.mxu0 0
    %255 = vmatprep.subr.bf16.mxu0 0
    %256 = vmatpush2.bf16.msra.mxu0 0
    %257 = vmatprep.subr.bf16.mxu0 0
    %258 = vmatpush2.bf16.msra.mxu0 0
    %259 = vmatprep.subr.bf16.mxu0 0
    %260 = vmatpush2.bf16.msra.mxu0 0
    %261 = vmatprep.subr.bf16.mxu0 0
    %262 = vmatpush2.bf16.msra.mxu0 0
    %263 = vmatprep.subr.bf16.mxu0 0
    %264 = vmatpush2.bf16.msra.mxu0 0
    %265 = vmatprep.mubr.bf16.mxu0 0
    %266 = vmatmul.mubr.bf16.gmra.mxu0 %v231
    %v267 = vpop.f32.mrf.mxu0
    %v268 = vadd.f32 %v216, %v267
    %v269 = vpop.f32.mrf.mxu0
    %v270 = vpop.f32.mrf.mxu0
    %v271 = vpop.f32.mrf.mxu0
    %272 = vdwg.mxu0
    %273 = vst [vmem:[#allocation10] sm:$0xff] %v268
    // Predicated region
    $region46: #{tpu_custom_call.1} parent=1 // pred_check
      _
    $region47: #{tpu_custom_call.1} parent=1 // pred_check_branch
      %275 = sbr.rel (0) target = $region49
    $region48: #{tpu_custom_call.1} parent=1 // pred_region
      %s277 = ssub.s32 128, 128
      %278 = vsyncadd [#allocation4], %s277
      %s280 = sshll.u32 [#allocation10], 4
      %s281 = int_to_ptr.vmem [resolvable:$true] %s280
      %283 = dma.vmem_to_hbm [thread:$0]  %s281, 128, %s7, [#allocation4]
    $region49: #{tpu_custom_call.1} parent=1 // pred_fallthru
      _
    // Predicated region
    $region50: #{tpu_custom_call.1} parent=1 // pred_check
      _
    $region51: #{tpu_custom_call.1} parent=1 // pred_check_branch
      %285 = sbr.rel (0) target = $region53
    $region52: #{tpu_custom_call.1} parent=1 // pred_region
      %286 = dma.done [#allocation4], 128
    $region53: #{tpu_custom_call.1} parent=1 // pred_fallthru
      _
    %287 = vsyncpa [#allocation3], 1
    %288 = vsyncpa [#allocation6], 1
    %289 = vsyncpa [#allocation9], 1
    %290 = vsyncpa [#allocation4], 1

// kernel: tpu_custom_call.1
$region0: #{tpu_custom_call.1}
  #allocation0 [shape = 'u32[]', space=smem, size = 0x4, offset = 0x4, fixed_abs, tag = 'smem constant byte address 0x4 - core index']
  #allocation1 [shape = 'u32[144,128]{1,0:T(1,128)}', space=vmem, size = 0x12000, scoped, tag = 'internal scratch']
  %s0 = inlined_call_operand.hbm [shape: bf16[8,8], index: 0, kind: input, shape index: {}]
  %s1 = inlined_call_operand.hbm [shape: bf16[8,32], index: 1, kind: input, shape index: {}]
  %s2 = inlined_call_operand.vmem [shape: f32[1,32], index: 2, kind: input, shape index: {}]
  %s3 = inlined_call_operand.hbm [shape: bf16[32,32], index: 3, kind: input, shape index: {}]
  %s4 = inlined_call_operand.vmem [shape: f32[1,32], index: 4, kind: input, shape index: {}]
  %s5 = inlined_call_operand.hbm [shape: bf16[32,128], index: 5, kind: input, shape index: {}]
  %s6 = inlined_call_operand.vmem [shape: f32[1,128], index: 6, kind: input, shape index: {}]
  %s7 = inlined_call_operand.hbm [shape: f32[8,128], index: 7, kind: output, shape index: {}]
  %s8 = sld [smem:[#allocation0]]
  $region54: #{tpu_custom_call.1} parent=0
    _
  %s10 = ssub.s32 1, %s8
  %s11 = scalar_select 0, %s10, %s8
  $region1: #{tpu_custom_call.1} parent=0
    #allocation2 [shape = 'u8[2048]{0}', space=vmem, size = 0x800, scoped, tag = 'input window, operand 0, single buffered']
    #allocation3 [shape = 's32[1]{0}', space=sflag, size = 0x4, scoped, tag = 'scoped memory for tpu_custom_call.1']
    #allocation4 [shape = 's32[1]{0}', space=sflag, size = 0x4, scoped, tag = 'scoped memory for tpu_custom_call.1']
    #allocation5 [shape = 'u8[2048]{0}', space=vmem, size = 0x800, scoped, tag = 'input window, operand 1, single buffered']
    #allocation6 [shape = 's32[1]{0}', space=sflag, size = 0x4, scoped, tag = 'scoped memory for tpu_custom_call.1']
    #allocation7 [shape = 'u8[8192]{0}', space=vmem, size = 0x2000, scoped, tag = 'input window, operand 3, single buffered']
    #allocation8 [shape = 'u8[8192]{0}', space=vmem, size = 0x2000, scoped, tag = 'input window, operand 5, single buffered']
    #allocation9 [shape = 's32[1]{0}', space=sflag, size = 0x4, scoped, tag = 'scoped memory for tpu_custom_call.1']
    #allocation10 [shape = 'u8[4096]{0}', space=vmem, size = 0x1000, scoped, tag = 'output window, operand 0, single buffered']
    %12 = vsyncpa [#allocation3], 0
    %13 = vsyncpa [#allocation6], 0
    %14 = vsyncpa [#allocation9], 0
    %15 = vsyncpa [#allocation4], 0
    // Predicated region
    $region2: #{tpu_custom_call.1} parent=1 // pred_check
      _
    $region3: #{tpu_custom_call.1} parent=1 // pred_check_branch
      %17 = sbr.rel (0) target = $region5
    $region4: #{tpu_custom_call.1} parent=1 // pred_region
      %s19 = ssub.s32 64, 64
      %20 = vsyncadd [#allocation3], %s19
      %s22 = sshll.u32 [#allocation2], 4
      %s23 = int_to_ptr.vmem [resolvable:$true] %s22
      %25 = dma.hbm_to_vmem [thread:$0]  %s0, 64, %s23, [#allocation3]
    $region5: #{tpu_custom_call.1} parent=1 // pred_fallthru
      _
    // Predicated region
    $region6: #{tpu_custom_call.1} parent=1 // pred_check
      _
    $region7: #{tpu_custom_call.1} parent=1 // pred_check_branch
      %27 = sbr.rel (0) target = $region9
    $region8: #{tpu_custom_call.1} parent=1 // pred_region
      %s29 = ssub.s32 64, 64
      %30 = vsyncadd [#allocation6], %s29
      %s32 = sshll.u32 [#allocation5], 4
      %s33 = int_to_ptr.vmem [resolvable:$true] %s32
      %35 = dma.hbm_to_vmem [thread:$0]  %s1, 64, %s33, [#allocation6]
    $region9: #{tpu_custom_call.1} parent=1 // pred_fallthru
      _
    // Predicated region
    $region10: #{tpu_custom_call.1} parent=1 // pred_check
      _
    $region11: #{tpu_custom_call.1} parent=1 // pred_check_branch
      %37 = sbr.rel (0) target = $region13
    $region12: #{tpu_custom_call.1} parent=1 // pred_region
      _
    $region13: #{tpu_custom_call.1} parent=1 // pred_fallthru
      _
    // Predicated region
    $region14: #{tpu_custom_call.1} parent=1 // pred_check
      _
    $region15: #{tpu_custom_call.1} parent=1 // pred_check_branch
      %39 = sbr.rel (0) target = $region17
    $region16: #{tpu_custom_call.1} parent=1 // pred_region
      %s41 = ssub.s32 256, 256
      %42 = vsyncadd [#allocation6], %s41
      %s43 = sshll.u32 [#allocation7], 4
      %s44 = int_to_ptr.vmem [resolvable:$true] %s43
      %49 = dma.hbm_to_vmem [thread:$0]  %s3, 256, %s44, [#allocation6], 64, 64, 4
    $region17: #{tpu_custom_call.1} parent=1 // pred_fallthru
      _
    // Predicated region
    $region18: #{tpu_custom_call.1} parent=1 // pred_check
      _
    $region19: #{tpu_custom_call.1} parent=1 // pred_check_branch
      %51 = sbr.rel (0) target = $region21
    $region20: #{tpu_custom_call.1} parent=1 // pred_region
      _
    $region21: #{tpu_custom_call.1} parent=1 // pred_fallthru
      _
    // Predicated region
    $region22: #{tpu_custom_call.1} parent=1 // pred_check
      _
    $region23: #{tpu_custom_call.1} parent=1 // pred_check_branch
      %53 = sbr.rel (0) target = $region25
    $region24: #{tpu_custom_call.1} parent=1 // pred_region
      %s55 = ssub.s32 256, 256
      %56 = vsyncadd [#allocation9], %s55
      %s57 = sshll.u32 [#allocation8], 4
      %s58 = int_to_ptr.vmem [resolvable:$true] %s57
      %63 = dma.hbm_to_vmem [thread:$0]  %s5, 256, %s58, [#allocation9], 64, 64, 4
    $region25: #{tpu_custom_call.1} parent=1 // pred_fallthru
      _
    // Predicated region
    $region26: #{tpu_custom_call.1} parent=1 // pred_check
      _
    $region27: #{tpu_custom_call.1} parent=1 // pred_check_branch
      %65 = sbr.rel (0) target = $region29
    $region28: #{tpu_custom_call.1} parent=1 // pred_region
      _
    $region29: #{tpu_custom_call.1} parent=1 // pred_fallthru
      _
    // Predicated region
    $region30: #{tpu_custom_call.1} parent=1 // pred_check
      _
    $region31: #{tpu_custom_call.1} parent=1 // pred_check_branch
      %67 = sbr.rel (0) target = $region33
    $region32: #{tpu_custom_call.1} parent=1 // pred_region
      %68 = dma.done [#allocation3], 64
    $region33: #{tpu_custom_call.1} parent=1 // pred_fallthru
      _
    // Predicated region
    $region34: #{tpu_custom_call.1} parent=1 // pred_check
      _
    $region35: #{tpu_custom_call.1} parent=1 // pred_check_branch
      %70 = sbr.rel (0) target = $region37
    $region36: #{tpu_custom_call.1} parent=1 // pred_region
      %71 = dma.done [#allocation6], 64
    $region37: #{tpu_custom_call.1} parent=1 // pred_fallthru
      _
    // Predicated region
    $region38: #{tpu_custom_call.1} parent=1 // pred_check
      _
    $region39: #{tpu_custom_call.1} parent=1 // pred_check_branch
      %73 = sbr.rel (0) target = $region41
    $region40: #{tpu_custom_call.1} parent=1 // pred_region
      %74 = dma.done [#allocation6], 256
    $region41: #{tpu_custom_call.1} parent=1 // pred_fallthru
      _
    // Predicated region
    $region42: #{tpu_custom_call.1} parent=1 // pred_check
      _
    $region43: #{tpu_custom_call.1} parent=1 // pred_check_branch
      %76 = sbr.rel (0) target = $region45
    $region44: #{tpu_custom_call.1} parent=1 // pred_region
      %77 = dma.done [#allocation9], 256
    $region45: #{tpu_custom_call.1} parent=1 // pred_fallthru
      _
    %v79 = vld [vmem:[#allocation2] sm:$0xf]
    %v80 = vld [vmem:[#allocation5] sm:$0xf]
    %v81 = vld [vmem:[%s2] sm:$0x1]
    %v83 = vlaneseq
    %v84 = vshrl.u32 %v83, 7
    %v85 = vsub.s32 0, %v84
    %v86 = vrot.slane %v81, %v85
    %vm88 = vcmask 64512
    %v90 = vsel %vm88, %v79, 0
    %vm92 = vcmask 1043456
    %v94 = vsel %vm92, %v80, 0
    %96 = vmatprep.subr.bf16.mxu0 0
    %97 = vmatpush1.bf16.msra.mxu0 0
    %98 = vmatprep.subr.bf16.mxu0 0
    %99 = vmatpush1.bf16.msra.mxu0 0
    %100 = vmatprep.subr.bf16.mxu0 0
    %101 = vmatpush1.bf16.msra.mxu0 0
    %102 = vmatprep.subr.bf16.mxu0 0
    %103 = vmatpush1.bf16.msra.mxu0 0
    %104 = vmatprep.subr.bf16.mxu0 0
    %105 = vmatpush1.bf16.msra.mxu0 0
    %106 = vmatprep.subr.bf16.mxu0 0
    %107 = vmatpush1.bf16.msra.mxu0 0
    %108 = vmatprep.subr.bf16.mxu0 0
    %109 = vmatpush1.bf16.msra.mxu0 0
    %110 = vmatprep.subr.bf16.mxu0 0
    %111 = vmatpush1.bf16.msra.mxu0 %v94
    %112 = vmatprep.subr.bf16.mxu0 0
    %113 = vmatpush2.bf16.msra.mxu0 0
    %114 = vmatprep.subr.bf16.mxu0 0
    %115 = vmatpush2.bf16.msra.mxu0 0
    %116 = vmatprep.subr.bf16.mxu0 0
    %117 = vmatpush2.bf16.msra.mxu0 0
    %118 = vmatprep.subr.bf16.mxu0 0
    %119 = vmatpush2.bf16.msra.mxu0 0
    %120 = vmatprep.subr.bf16.mxu0 0
    %121 = vmatpush2.bf16.msra.mxu0 0
    %122 = vmatprep.subr.bf16.mxu0 0
    %123 = vmatpush2.bf16.msra.mxu0 0
    %124 = vmatprep.subr.bf16.mxu0 0
    %125 = vmatpush2.bf16.msra.mxu0 0
    %126 = vmatprep.subr.bf16.mxu0 0
    %127 = vmatpush2.bf16.msra.mxu0 0
    %128 = vmatprep.mubr.bf16.mxu0 0
    %129 = vmatmul.mubr.bf16.gmra.mxu0 %v90
    %v130 = vpop.f32.mrf.mxu0
    %v131 = vadd.f32 %v86, %v130
    %v132 = vpop.f32.mrf.mxu0
    %v133 = vpop.f32.mrf.mxu0
    %v134 = vpop.f32.mrf.mxu0
    %135 = vdwg.mxu0
    %v136 = vmax.f32 %v131, 0.0
    %v137 = vpack.c.bf16 %v136, %v136
    %v138 = vld [vmem:[#allocation7] sm:$0xf]
    %v139 = vld [vmem:[#allocation7 + $0x4] sm:$0xf]
    %v140 = vld [vmem:[#allocation7 + $0x8] sm:$0xf]
    %v141 = vld [vmem:[#allocation7 + $0xc] sm:$0xf]
    %v142 = vld [vmem:[%s4] sm:$0x1]
    %v144 = vlaneseq
    %v145 = vshrl.u32 %v144, 7
    %v146 = vsub.s32 0, %v145
    %v147 = vrot.slane %v142, %v146
    %v153 = vunpack.c.l.b16 %v138
    %v154 = vunpack.c.l.b16 %v139
    %v155 = vunpack.c.l.b16 %v140
    %v156 = vunpack.c.l.b16 %v141
    %v157 = vpack.c.b16 %v154, %v153
    %v158 = vpack.c.b16 %v156, %v155
    %vm161 = vcmask 261120
    %v163 = vsel %vm161, %v137, 0
    %165 = vmatprep.subr.bf16.mxu0 0
    %166 = vmatpush1.bf16.msra.mxu0 0
    %167 = vmatprep.subr.bf16.mxu0 0
    %168 = vmatpush1.bf16.msra.mxu0 0
    %169 = vmatprep.subr.bf16.mxu0 0
    %170 = vmatpush1.bf16.msra.mxu0 0
    %171 = vmatprep.subr.bf16.mxu0 0
    %172 = vmatpush1.bf16.msra.mxu0 0
    %173 = vmatprep.subr.bf16.mxu0 0
    %174 = vmatpush1.bf16.msra.mxu0 0
    %175 = vmatprep.subr.bf16.mxu0 0
    %176 = vmatpush1.bf16.msra.mxu0 0
    %177 = vmatprep.subr.bf16.mxu0 0
    %178 = vmatpush1.bf16.msra.mxu0 %v158
    %179 = vmatprep.subr.bf16.mxu0 0
    %180 = vmatpush1.bf16.msra.mxu0 %v157
    %181 = vmatprep.subr.bf16.mxu0 0
    %182 = vmatpush2.bf16.msra.mxu0 0
    %183 = vmatprep.subr.bf16.mxu0 0
    %184 = vmatpush2.bf16.msra.mxu0 0
    %185 = vmatprep.subr.bf16.mxu0 0
    %186 = vmatpush2.bf16.msra.mxu0 0
    %187 = vmatprep.subr.bf16.mxu0 0
    %188 = vmatpush2.bf16.msra.mxu0 0
    %189 = vmatprep.subr.bf16.mxu0 0
    %190 = vmatpush2.bf16.msra.mxu0 0
    %191 = vmatprep.subr.bf16.mxu0 0
    %192 = vmatpush2.bf16.msra.mxu0 0
    %193 = vmatprep.subr.bf16.mxu0 0
    %194 = vmatpush2.bf16.msra.mxu0 0
    %195 = vmatprep.subr.bf16.mxu0 0
    %196 = vmatpush2.bf16.msra.mxu0 0
    %197 = vmatprep.mubr.bf16.mxu0 0
    %198 = vmatmul.mubr.bf16.gmra.mxu0 %v163
    %v199 = vpop.f32.mrf.mxu0
    %v200 = vadd.f32 %v147, %v199
    %v201 = vpop.f32.mrf.mxu0
    %v202 = vpop.f32.mrf.mxu0
    %v203 = vpop.f32.mrf.mxu0
    %204 = vdwg.mxu0
    %v205 = vmax.f32 %v200, 0.0
    %v206 = vpack.c.bf16 %v205, %v205
    %v207 = vld [vmem:[#allocation8] sm:$0xf]
    %v208 = vld [vmem:[#allocation8 + $0x4] sm:$0xf]
    %v209 = vld [vmem:[#allocation8 + $0x8] sm:$0xf]
    %v210 = vld [vmem:[#allocation8 + $0xc] sm:$0xf]
    %v211 = vld [vmem:[%s6] sm:$0x1]
    %v213 = vlaneseq
    %v214 = vshrl.u32 %v213, 7
    %v215 = vsub.s32 0, %v214
    %v216 = vrot.slane %v211, %v215
    %v222 = vunpack.c.l.b16 %v207
    %v223 = vunpack.c.l.b16 %v208
    %v224 = vunpack.c.l.b16 %v209
    %v225 = vunpack.c.l.b16 %v210
    %v226 = vpack.c.b16 %v223, %v222
    %v227 = vpack.c.b16 %v225, %v224
    %v231 = vsel %vm161, %v206, 0
    %233 = vmatprep.subr.bf16.mxu0 0
    %234 = vmatpush1.bf16.msra.mxu0 0
    %235 = vmatprep.subr.bf16.mxu0 0
    %236 = vmatpush1.bf16.msra.mxu0 0
    %237 = vmatprep.subr.bf16.mxu0 0
    %238 = vmatpush1.bf16.msra.mxu0 0
    %239 = vmatprep.subr.bf16.mxu0 0
    %240 = vmatpush1.bf16.msra.mxu0 0
    %241 = vmatprep.subr.bf16.mxu0 0
    %242 = vmatpush1.bf16.msra.mxu0 0
    %243 = vmatprep.subr.bf16.mxu0 0
    %244 = vmatpush1.bf16.msra.mxu0 0
    %245 = vmatprep.subr.bf16.mxu0 0
    %246 = vmatpush1.bf16.msra.mxu0 %v227
    %247 = vmatprep.subr.bf16.mxu0 0
    %248 = vmatpush1.bf16.msra.mxu0 %v226
    %249 = vmatprep.subr.bf16.mxu0 0
    %250 = vmatpush2.bf16.msra.mxu0 0
    %251 = vmatprep.subr.bf16.mxu0 0
    %252 = vmatpush2.bf16.msra.mxu0 0
    %253 = vmatprep.subr.bf16.mxu0 0
    %254 = vmatpush2.bf16.msra.mxu0 0
    %255 = vmatprep.subr.bf16.mxu0 0
    %256 = vmatpush2.bf16.msra.mxu0 0
    %257 = vmatprep.subr.bf16.mxu0 0
    %258 = vmatpush2.bf16.msra.mxu0 0
    %259 = vmatprep.subr.bf16.mxu0 0
    %260 = vmatpush2.bf16.msra.mxu0 0
    %261 = vmatprep.subr.bf16.mxu0 0
    %262 = vmatpush2.bf16.msra.mxu0 0
    %263 = vmatprep.subr.bf16.mxu0 0
    %264 = vmatpush2.bf16.msra.mxu0 0
    %265 = vmatprep.mubr.bf16.mxu0 0
    %266 = vmatmul.mubr.bf16.gmra.mxu0 %v231
    %v267 = vpop.f32.mrf.mxu0
    %v268 = vadd.f32 %v216, %v267
    %v269 = vpop.f32.mrf.mxu0
    %v270 = vpop.f32.mrf.mxu0
    %v271 = vpop.f32.mrf.mxu0
    %272 = vdwg.mxu0
    %273 = vst [vmem:[#allocation10] sm:$0xff] %v268
    // Predicated region
    $region46: #{tpu_custom_call.1} parent=1 // pred_check
      _
    $region47: #{tpu_custom_call.1} parent=1 // pred_check_branch
      %275 = sbr.rel (0) target = $region49
    $region48: #{tpu_custom_call.1} parent=1 // pred_region
      %s277 = ssub.s32 128, 128
      %278 = vsyncadd [#allocation4], %s277
      %s280 = sshll.u32 [#allocation10], 4
      %s281 = int_to_ptr.vmem [resolvable:$true] %s280
      %283 = dma.vmem_to_hbm [thread:$0]  %s281, 128, %s7, [#allocation4]
    $region49: #{tpu_custom_call.1} parent=1 // pred_fallthru
      _
    // Predicated region
    $region50: #{tpu_custom_call.1} parent=1 // pred_check
      _
    $region51: #{tpu_custom_call.1} parent=1 // pred_check_branch
      %285 = sbr.rel (0) target = $region53
    $region52: #{tpu_custom_call.1} parent=1 // pred_region
      %286 = dma.done [#allocation4], 128
    $region53: #{tpu_custom_call.1} parent=1 // pred_fallthru
      _
    %287 = vsyncpa [#allocation3], 1
    %288 = vsyncpa [#allocation6], 1
    %289 = vsyncpa [#allocation9], 1
    %290 = vsyncpa [#allocation4], 1

</llo_original>
